<compile_context>
chip_gen: v5e
topology: v5e:2x2
jax: 0.10.0
libtpu: 0.0.40
codegen_flags: <defaults>
</compile_context>

<pallas_src>
import random

import numpy as np
import jax
import jax.numpy as jnp
from jax.experimental import pallas as pl
from jax.experimental.pallas import tpu as pltpu


def _round_up(x, m):
    return ((x + m - 1) // m) * m


def _pad2d(x, rows, cols, dtype):
    """Cast + zero-pad in (at most) one pad op; no-op when already aligned."""
    x = x.astype(dtype)
    pr, pc = rows - x.shape[0], cols - x.shape[1]
    if pr or pc:
        x = jnp.pad(x, ((0, pr), (0, pc)))
    return x


# ---------------------------------------------------------------------------
# Fused kernel:  scores = ((mask @ embed) * inv_deg) @ weight^T
#   grid = (B-tiles, U-tiles); U is the reduction axis (innermost).
#   weight^T block has a constant index_map -> DMA'd once, VMEM-resident.
# ---------------------------------------------------------------------------
def gcn_fused_kernel(mask_ref, embed_ref, wT_ref, inv_ref, out_ref, acc_ref):
    k = pl.program_id(1)

    @pl.when(k == 0)
    def _init():
        acc_ref[...] = jnp.zeros_like(acc_ref)

    # bf16 x bf16 on the MXU with f32 accumulation; the inner loop is pure DMA + MXU.
    acc_ref[...] += jnp.dot(mask_ref[...], embed_ref[...],
                            preferred_element_type=jnp.float32)

    @pl.when(k == pl.num_programs(1) - 1)
    def _finalize():
        # Mean-aggregated features (exact, precomputed 1/deg), immediately pushed
        # through the tiny classifier matmul so feats never hit HBM.
        feats = acc_ref[...] * inv_ref[...]                     # (tm, Dp) * (tm, 1)
        out_ref[...] = jnp.dot(feats.astype(jnp.bfloat16), wT_ref[...],
                               preferred_element_type=jnp.float32)


def gcn_forward(mask, embed, weight, *, tm=512, tk=1024):
    """torch GCN.forward: ((mask / num_neigh) @ embed) @ weight.T   -> (B, num_classes)."""
    B, U = mask.shape
    U2, D = embed.shape
    C, D2 = weight.shape
    assert U == U2 and D == D2

    # Lane/sublane-aligned tiles, clamped so tiny problems still get valid blocks.
    tm = min(tm, _round_up(B, 8))
    tk = min(tk, _round_up(U, 128))
    # v7x megacore: give the 'parallel' B axis >= 2 blocks when the batch allows it.
    if B > 8 and _round_up(B, tm) // tm < 2:
        tm = max(8, _round_up((B + 1) // 2, 8))

    Bp = _round_up(B, tm)
    Up = _round_up(U, tk)
    Dp = _round_up(D, 128)
    Cp = _round_up(C, 128)   # 128-wide output tile -> unmasked lane-dense stores

    # bf16 operands (mask is exactly 0/1 in bf16); single cast+pad per array.
    mask_p = _pad2d(mask, Bp, Up, jnp.bfloat16)
    embed_p = _pad2d(embed, Up, Dp, jnp.bfloat16)
    wT_p = _pad2d(weight.T, Dp, Cp, jnp.bfloat16)

    # Exact per-row 1/degree (guard empty neighborhoods with 0-output, as before).
    deg = jnp.sum(mask.astype(jnp.float32), axis=1, keepdims=True)
    inv_p = _pad2d(1.0 / jnp.maximum(deg, 1.0), Bp, 1, jnp.float32)

    grid = (Bp // tm, Up // tk)   # reduction (U) axis last / innermost

    out_p = pl.pallas_call(
        gcn_fused_kernel,
        out_shape=jax.ShapeDtypeStruct((Bp, Cp), jnp.float32),
        grid_spec=pltpu.PrefetchScalarGridSpec(
            num_scalar_prefetch=0,
            grid=grid,
            in_specs=[
                pl.BlockSpec((tm, tk), lambda i, k: (i, k)),    # mask tile
                pl.BlockSpec((tk, Dp), lambda i, k: (k, 0)),    # embed tile (full D)
                pl.BlockSpec((Dp, Cp), lambda i, k: (0, 0)),    # weight^T, VMEM-resident
                pl.BlockSpec((tm, 1), lambda i, k: (i, 0)),     # exact 1/deg per row
            ],
            out_specs=pl.BlockSpec((tm, Cp), lambda i, k: (i, 0)),
            scratch_shapes=[pltpu.VMEM((tm, Dp), jnp.float32)],  # f32 feat accumulator
        ),
        compiler_params=pltpu.CompilerParams(
            dimension_semantics=("parallel", "arbitrary"),
            vmem_limit_bytes=48 * 1024 * 1024,   # inside v7x's 64 MiB physical VMEM
        ),
    )(mask_p, embed_p, wT_p, inv_p)

    return out_p[:B, :C]


# ---------------------------------------------------------------------------
# Host-side glue: replica of the torch MeanAggregator set/indexing logic.
# ---------------------------------------------------------------------------
def build_mask_and_unique(nodes, to_neighs, num_sample=None, gcn=False):
    if num_sample is not None:
        samp_neighs = [
            set(random.sample(sorted(tn), num_sample)) if len(tn) >= num_sample else tn
            for tn in to_neighs
        ]
    else:
        samp_neighs = to_neighs
    if gcn:
        samp_neighs = [sn.union({int(nodes[i])}) for i, sn in enumerate(samp_neighs)]
    unique_nodes_list = list(set.union(*samp_neighs))
    unique_nodes = {n: i for i, n in enumerate(unique_nodes_list)}
    mask = np.zeros((len(samp_neighs), len(unique_nodes)), dtype=np.float32)
    for i, sn in enumerate(samp_neighs):
        for n in sn:
            mask[i, unique_nodes[n]] = 1.0
    return mask, unique_nodes_list


if __name__ == "__main__":
    random.seed(0)

    num_nodes_total = 40   # total nodes in the synthetic graph
    feat_dim = 32          # encoder embedding dimension
    batch_size = 8         # nodes in the batch
    num_classes = 7        # GCN output classes

    key = jax.random.PRNGKey(0)
    k_emb, k_w = jax.random.split(key)

    # Deterministic embedding table standing in for the `features` lookup fn.
    embedding_table = jax.random.normal(k_emb, (num_nodes_total, feat_dim), dtype=jnp.float32)

    # GCN classifier weight (xavier-uniform-like), shape (num_classes, embed_dim).
    bound = float(np.sqrt(6.0 / (num_classes + feat_dim)))
    gcn_weight = jax.random.uniform(
        k_w, (num_classes, feat_dim), minval=-bound, maxval=bound, dtype=jnp.float32
    )

    # Synthetic graph: every node gets 5 random neighbors (no empty neighborhoods).
    adj = {n: set(random.sample(range(num_nodes_total), 5)) for n in range(num_nodes_total)}
    nodes = list(range(batch_size))
    to_neighs = [adj[n] for n in nodes]

    # Host-side glue: dense 0/1 mask and the unique-node ordering.
    mask_np, unique_nodes_list = build_mask_and_unique(nodes, to_neighs, num_sample=None, gcn=False)
    embed_matrix = jnp.take(
        embedding_table, jnp.asarray(unique_nodes_list, dtype=jnp.int32), axis=0
    )
    mask = jnp.asarray(mask_np)

    # ---- GCN forward (single fused Pallas kernel) ----
    scores = gcn_forward(mask, embed_matrix, gcn_weight)       # (B, num_classes)
    jax.block_until_ready(scores)

    # ---- Correctness check vs plain-JAX reference of the torch math ----
    num_neigh = jnp.maximum(jnp.sum(mask, axis=1, keepdims=True), 1.0)
    feats_ref = (mask / num_neigh) @ embed_matrix
    scores_ref = feats_ref @ gcn_weight.T
    assert scores.shape == (batch_size, num_classes)
    # bf16 MXU operands: compare to the f32 reference at bf16-level tolerance.
    np.testing.assert_allclose(np.asarray(scores), np.asarray(scores_ref), rtol=2e-2, atol=2e-2)

    print("KERNEL_OK")
</pallas_src>

<mosaic_0001>
module attributes {stable_mosaic.version = 11 : i64} {
  func.func @gcn_fused_kernel(%arg0: i32, %arg1: i32, %arg2: memref<8x128xbf16, #tpu.memory_space<vmem>>, %arg3: memref<128x128xbf16, #tpu.memory_space<vmem>>, %arg4: memref<128x128xbf16, #tpu.memory_space<vmem>>, %arg5: memref<8x1xf32, #tpu.memory_space<vmem>>, %arg6: memref<8x128xf32, #tpu.memory_space<vmem>>, %arg7: memref<8x128xf32, #tpu.memory_space<vmem>>) attributes {dimension_semantics = [#tpu.dimension_semantics<parallel>, #tpu.dimension_semantics<arbitrary>], iteration_bounds = array<i64: 1, 1>, scalar_prefetch = 0 : i64, scratch_operands = 1 : i64, tpu.core_type = #tpu.core_type<tc>, window_params = [{transform_indices = @transform_0, window_bounds = array<i64: 8, 128>}, {transform_indices = @transform_1, window_bounds = array<i64: 128, 128>}, {pipeline_mode = #tpu.pipeline_mode<synchronous>, transform_indices = @transform_2, window_bounds = array<i64: 128, 128>}, {transform_indices = @transform_3, window_bounds = array<i64: 8, 1>}, {transform_indices = @transform_4, window_bounds = array<i64: 8, 128>}]} {
    %c0_i32 = arith.constant 0 : i32
    %0 = arith.cmpi eq, %arg1, %c0_i32 : i32
    %1 = arith.extui %0 : i1 to i32
    %c0_i32_0 = arith.constant 0 : i32
    %2 = arith.cmpi ne, %1, %c0_i32_0 : i32
    scf.if %2 {
      %cst_10 = arith.constant 0.000000e+00 : f32
      %12 = vector.broadcast %cst_10 : f32 to vector<8x128xf32>
      %c0_11 = arith.constant 0 : index
      %c0_12 = arith.constant 0 : index
      %13 = vector.load %arg7[%c0_11, %c0_12] : memref<8x128xf32, #tpu.memory_space<vmem>>, vector<8x128xf32>
      tpu.vector_store %arg7[%c0_11, %c0_12], %12 {strides = array<i32>} : memref<8x128xf32, #tpu.memory_space<vmem>>, vector<8x128xf32>,
    } else {
    }
    %c0 = arith.constant 0 : index
    %c0_1 = arith.constant 0 : index
    %3 = vector.load %arg7[%c0, %c0_1] : memref<8x128xf32, #tpu.memory_space<vmem>>, vector<8x128xf32>
    %c0_2 = arith.constant 0 : index
    %c0_3 = arith.constant 0 : index
    %4 = vector.load %arg2[%c0_2, %c0_3] : memref<8x128xbf16, #tpu.memory_space<vmem>>, vector<8x128xbf16>
    %c0_4 = arith.constant 0 : index
    %c0_5 = arith.constant 0 : index
    %5 = vector.load %arg3[%c0_4, %c0_5] : memref<128x128xbf16, #tpu.memory_space<vmem>>, vector<128x128xbf16>
    %cst = arith.constant dense<0.000000e+00> : vector<8x128xf32>
    %6 = tpu.matmul %4, %5, %cst {dimension_numbers = #tpu.dot_dimension_numbers<[1], [0], [0], [1], [0, 0, 1, 1], [], []>} : vector<8x128xbf16>, vector<128x128xbf16>, vector<8x128xf32> -> vector<8x128xf32>
    %7 = arith.addf %3, %6 : vector<8x128xf32>
    %c0_6 = arith.constant 0 : index
    %c0_7 = arith.constant 0 : index
    %8 = vector.load %arg7[%c0_6, %c0_7] : memref<8x128xf32, #tpu.memory_space<vmem>>, vector<8x128xf32>
    tpu.vector_store %arg7[%c0_6, %c0_7], %7 {strides = array<i32>} : memref<8x128xf32, #tpu.memory_space<vmem>>, vector<8x128xf32>,
    %c0_i32_8 = arith.constant 0 : i32
    %9 = arith.cmpi eq, %arg1, %c0_i32_8 : i32
    %10 = arith.extui %9 : i1 to i32
    %c0_i32_9 = arith.constant 0 : i32
    %11 = arith.cmpi ne, %10, %c0_i32_9 : i32
    scf.if %11 {
      %c0_10 = arith.constant 0 : index
      %c0_11 = arith.constant 0 : index
      %12 = vector.load %arg7[%c0_10, %c0_11] : memref<8x128xf32, #tpu.memory_space<vmem>>, vector<8x128xf32>
      %c0_12 = arith.constant 0 : index
      %c0_13 = arith.constant 0 : index
      %13 = vector.load %arg5[%c0_12, %c0_13] : memref<8x1xf32, #tpu.memory_space<vmem>>, vector<8x1xf32>
      %14 = vector.broadcast %13 : vector<8x1xf32> to vector<8x128xf32>
      %15 = arith.mulf %12, %14 : vector<8x128xf32>
      %16 = arith.truncf %15 : vector<8x128xf32> to vector<8x128xbf16>
      %c0_14 = arith.constant 0 : index
      %c0_15 = arith.constant 0 : index
      %17 = vector.load %arg4[%c0_14, %c0_15] : memref<128x128xbf16, #tpu.memory_space<vmem>>, vector<128x128xbf16>
      %cst_16 = arith.constant dense<0.000000e+00> : vector<8x128xf32>
      %18 = tpu.matmul %16, %17, %cst_16 {dimension_numbers = #tpu.dot_dimension_numbers<[1], [0], [0], [1], [0, 0, 1, 1], [], []>} : vector<8x128xbf16>, vector<128x128xbf16>, vector<8x128xf32> -> vector<8x128xf32>
      %c0_17 = arith.constant 0 : index
      %c0_18 = arith.constant 0 : index
      %19 = vector.load %arg6[%c0_17, %c0_18] : memref<8x128xf32, #tpu.memory_space<vmem>>, vector<8x128xf32>
      tpu.vector_store %arg6[%c0_17, %c0_18], %18 {strides = array<i32>} : memref<8x128xf32, #tpu.memory_space<vmem>>, vector<8x128xf32>,
    } else {
    }
    return
  }
  func.func @transform_0(%arg0: i32, %arg1: i32) -> (i32, i32) {
    %c0_i32 = arith.constant 0 : i32
    return %arg0, %arg1 : i32, i32
  }
  func.func @transform_1(%arg0: i32, %arg1: i32) -> (i32, i32) {
    %c0_i32 = arith.constant 0 : i32
    %c0_i32_0 = arith.constant 0 : i32
    return %arg1, %c0_i32 : i32, i32
  }
  func.func @transform_2(%arg0: i32, %arg1: i32) -> (i32, i32) {
    %c0_i32 = arith.constant 0 : i32
    %c0_i32_0 = arith.constant 0 : i32
    %c0_i32_1 = arith.constant 0 : i32
    return %c0_i32, %c0_i32_0 : i32, i32
  }
  func.func @transform_3(%arg0: i32, %arg1: i32) -> (i32, i32) {
    %c0_i32 = arith.constant 0 : i32
    %c0_i32_0 = arith.constant 0 : i32
    return %arg0, %c0_i32 : i32, i32
  }
  func.func @transform_4(%arg0: i32, %arg1: i32) -> (i32, i32) {
    %c0_i32 = arith.constant 0 : i32
    %c0_i32_0 = arith.constant 0 : i32
    return %arg0, %c0_i32 : i32, i32
  }
}

</mosaic_0001>

<llo_original>
// kernel: tpu_custom_call.1
$region0: #{tpu_custom_call.1}
  #allocation0 [shape = 'u32[]', space=smem, size = 0x4, offset = 0x4, fixed_abs, tag = 'smem constant byte address 0x4 - core index']
  #allocation1 [shape = 'u32[72,128]{1,0:T(1,128)}', space=vmem, size = 0x9000, scoped, tag = 'internal scratch']
  #allocation2 [shape = 'f32[8,128]{1,0:T(8,128)}', space=vmem, size = 0x1000, scoped, tag = 'scratch operand']
  %s0 = inlined_call_operand.vmem [shape: bf16[8,128], index: 0, kind: input, shape index: {}]
  %s1 = inlined_call_operand.hbm [shape: bf16[128,128], index: 1, kind: input, shape index: {}]
  %s2 = inlined_call_operand.hbm [shape: bf16[128,128], index: 2, kind: input, shape index: {}]
  %s3 = inlined_call_operand.vmem [shape: f32[8,1], index: 3, kind: input, shape index: {}]
  %s4 = inlined_call_operand.hbm [shape: f32[8,128], index: 4, kind: output, shape index: {}]
  %s5 = sld [smem:[#allocation0]]
  $region42: #{tpu_custom_call.1} parent=0
    _
  %s7 = ssub.s32 1, %s5
  %s8 = scalar_select 0, %s7, %s5
  $region1: #{tpu_custom_call.1} parent=0
    #allocation3 [shape = 'u8[32768]{0}', space=vmem, size = 0x8000, scoped, tag = 'input window, operand 1, single buffered']
    #allocation4 [shape = 's32[1]{0}', space=sflag, size = 0x4, scoped, tag = 'scoped memory for tpu_custom_call.1']
    #allocation5 [shape = 's32[1]{0}', space=sflag, size = 0x4, scoped, tag = 'scoped memory for tpu_custom_call.1']
    #allocation6 [shape = 'u8[32768]{0}', space=vmem, size = 0x8000, scoped, tag = 'input window, operand 2, single buffered']
    #allocation7 [shape = 's32[1]{0}', space=sflag, size = 0x4, scoped, tag = 'scoped memory for tpu_custom_call.1']
    #allocation8 [shape = 'u8[4096]{0}', space=vmem, size = 0x1000, scoped, tag = 'output window, operand 0, single buffered']
    %9 = vsyncpa [#allocation4], 0
    %10 = vsyncpa [#allocation7], 0
    %11 = vsyncpa [#allocation5], 0
    // Predicated region
    $region2: #{tpu_custom_call.1} parent=1 // pred_check
      _
    $region3: #{tpu_custom_call.1} parent=1 // pred_check_branch
      %13 = sbr.rel (0) target = $region5
    $region4: #{tpu_custom_call.1} parent=1 // pred_region
      _
    $region5: #{tpu_custom_call.1} parent=1 // pred_fallthru
      _
    // Predicated region
    $region6: #{tpu_custom_call.1} parent=1 // pred_check
      _
    $region7: #{tpu_custom_call.1} parent=1 // pred_check_branch
      %15 = sbr.rel (0) target = $region9
    $region8: #{tpu_custom_call.1} parent=1 // pred_region
      %17 = vsyncadd [#allocation4], 0
      %s18 = sshll.u32 %s1, 4
      %s19 = int_to_ptr.hbm [resolvable:$true] %s18
      %s20 = sshll.u32 [#allocation3], 4
      %s21 = int_to_ptr.vmem [resolvable:$true] %s20
      %26 = dma.hbm_to_vmem [thread:$0]  %s19, 1024, %s21, [#allocation4], 64, 64, 4
    $region9: #{tpu_custom_call.1} parent=1 // pred_fallthru
      _
    // Predicated region
    $region10: #{tpu_custom_call.1} parent=1 // pred_check
      _
    $region11: #{tpu_custom_call.1} parent=1 // pred_check_branch
      %28 = sbr.rel (0) target = $region13
    $region12: #{tpu_custom_call.1} parent=1 // pred_region
      %30 = vsyncadd [#allocation7], 0
      %s31 = sshll.u32 %s2, 4
      %s32 = int_to_ptr.hbm [resolvable:$true] %s31
      %s33 = sshll.u32 [#allocation6], 4
      %s34 = int_to_ptr.vmem [resolvable:$true] %s33
      %39 = dma.hbm_to_vmem [thread:$0]  %s32, 1024, %s34, [#allocation7], 64, 64, 4
    $region13: #{tpu_custom_call.1} parent=1 // pred_fallthru
      _
    // Predicated region
    $region14: #{tpu_custom_call.1} parent=1 // pred_check
      _
    $region15: #{tpu_custom_call.1} parent=1 // pred_check_branch
      %41 = sbr.rel (0) target = $region17
    $region16: #{tpu_custom_call.1} parent=1 // pred_region
      _
    $region17: #{tpu_custom_call.1} parent=1 // pred_fallthru
      _
    // Predicated region
    $region18: #{tpu_custom_call.1} parent=1 // pred_check
      _
    $region19: #{tpu_custom_call.1} parent=1 // pred_check_branch
      %43 = sbr.rel (0) target = $region21
    $region20: #{tpu_custom_call.1} parent=1 // pred_region
      %45 = dma.done [#allocation4], 1024
    $region21: #{tpu_custom_call.1} parent=1 // pred_fallthru
      _
    // Predicated region
    $region22: #{tpu_custom_call.1} parent=1 // pred_check
      _
    $region23: #{tpu_custom_call.1} parent=1 // pred_check_branch
      %47 = sbr.rel (0) target = $region25
    $region24: #{tpu_custom_call.1} parent=1 // pred_region
      %49 = dma.done [#allocation7], 1024
    $region25: #{tpu_custom_call.1} parent=1 // pred_fallthru
      _
    %p50 = scmp.eq.s32.totalorder 0, 0
    // Predicated region
    $region26: #{tpu_custom_call.1} parent=1 // pred_check
      %p51 = pneg %p50
    $region27: #{tpu_custom_call.1} parent=1 // pred_check_branch
      %53 = sbr.rel (%p51) target = $region29
    $region28: #{tpu_custom_call.1} parent=1 // pred_region
      %54 = vst [vmem:[#allocation2] sm:$0xff] 0.0
    $region29: #{tpu_custom_call.1} parent=1 // pred_fallthru
      _
    %v55 = vld [vmem:[#allocation2] sm:$0xff]
    %v56 = vld [vmem:[%s0] sm:$0xf]
    %v57 = vld [vmem:[#allocation3] sm:$0xf]
    %v58 = vld [vmem:[#allocation3 + $0x4] sm:$0xf]
    %v59 = vld [vmem:[#allocation3 + $0x8] sm:$0xf]
    %v60 = vld [vmem:[#allocation3 + $0xc] sm:$0xf]
    %v61 = vld [vmem:[#allocation3 + $0x10] sm:$0xf]
    %v62 = vld [vmem:[#allocation3 + $0x14] sm:$0xf]
    %v63 = vld [vmem:[#allocation3 + $0x18] sm:$0xf]
    %v64 = vld [vmem:[#allocation3 + $0x1c] sm:$0xf]
    %v65 = vld [vmem:[#allocation3 + $0x20] sm:$0xf]
    %v66 = vld [vmem:[#allocation3 + $0x24] sm:$0xf]
    %v67 = vld [vmem:[#allocation3 + $0x28] sm:$0xf]
    %v68 = vld [vmem:[#allocation3 + $0x2c] sm:$0xf]
    %v69 = vld [vmem:[#allocation3 + $0x30] sm:$0xf]
    %v70 = vld [vmem:[#allocation3 + $0x34] sm:$0xf]
    %v71 = vld [vmem:[#allocation3 + $0x38] sm:$0xf]
    %v72 = vld [vmem:[#allocation3 + $0x3c] sm:$0xf]
    %v89 = vunpack.c.l.b16 %v57
    %v90 = vunpack.c.l.b16 %v58
    %v91 = vunpack.c.l.b16 %v59
    %v92 = vunpack.c.l.b16 %v60
    %v93 = vunpack.c.l.b16 %v61
    %v94 = vunpack.c.l.b16 %v62
    %v95 = vunpack.c.l.b16 %v63
    %v96 = vunpack.c.l.b16 %v64
    %v97 = vunpack.c.l.b16 %v65
    %v98 = vunpack.c.l.b16 %v66
    %v99 = vunpack.c.l.b16 %v67
    %v100 = vunpack.c.l.b16 %v68
    %v101 = vunpack.c.l.b16 %v69
    %v102 = vunpack.c.l.b16 %v70
    %v103 = vunpack.c.l.b16 %v71
    %v104 = vunpack.c.l.b16 %v72
    %v105 = vpack.c.b16 %v90, %v89
    %v106 = vpack.c.b16 %v92, %v91
    %v107 = vpack.c.b16 %v94, %v93
    %v108 = vpack.c.b16 %v96, %v95
    %v109 = vpack.c.b16 %v98, %v97
    %v110 = vpack.c.b16 %v100, %v99
    %v111 = vpack.c.b16 %v102, %v101
    %v112 = vpack.c.b16 %v104, %v103
    %121 = vmatpush.bf16.msra.mxu0 %v112
    %122 = vmatpush.bf16.msra.mxu0 %v111
    %123 = vmatpush.bf16.msra.mxu0 %v110
    %124 = vmatpush.bf16.msra.mxu0 %v109
    %125 = vmatpush.bf16.msra.mxu0 %v108
    %126 = vmatpush.bf16.msra.mxu0 %v107
    %127 = vmatpush.bf16.msra.mxu0 %v106
    %128 = vmatpush.bf16.msra.mxu0 %v105
    %129 = vmatmul.bf16.gmra.mxu0 %v56
    %v130 = vpop.f32.mrf.mxu0
    %v131 = vadd.f32 0.0, %v130
    %v132 = vpop.f32.mrf.mxu0
    %133 = vdwg.mxu0
    %v134 = vadd.f32 %v55, %v131
    %135 = vst [vmem:[#allocation2] sm:$0xff] %v134
    // Predicated region
    $region30: #{tpu_custom_call.1} parent=1 // pred_check
      %p136 = pneg %p50
    $region31: #{tpu_custom_call.1} parent=1 // pred_check_branch
      %138 = sbr.rel (%p136) target = $region33
    $region32: #{tpu_custom_call.1} parent=1 // pred_region
      %v139 = vld [vmem:[#allocation2] sm:$0xff]
      %v140 = vld [vmem:[%s3] sm:$0xff]
      %142 = vset.pattern.permute.xlu0 0
      %143 = vperm.xlu0 %142, %v140
      %v144 = vpop.permute.xlu0 %143
      %v146 = vmul.f32 %v139, %v144
      %v147 = vpack.c.bf16 %v146, %v146
      %v148 = vld [vmem:[#allocation6] sm:$0xf]
      %v149 = vld [vmem:[#allocation6 + $0x4] sm:$0xf]
      %v150 = vld [vmem:[#allocation6 + $0x8] sm:$0xf]
      %v151 = vld [vmem:[#allocation6 + $0xc] sm:$0xf]
      %v152 = vld [vmem:[#allocation6 + $0x10] sm:$0xf]
      %v153 = vld [vmem:[#allocation6 + $0x14] sm:$0xf]
      %v154 = vld [vmem:[#allocation6 + $0x18] sm:$0xf]
      %v155 = vld [vmem:[#allocation6 + $0x1c] sm:$0xf]
      %v156 = vld [vmem:[#allocation6 + $0x20] sm:$0xf]
      %v157 = vld [vmem:[#allocation6 + $0x24] sm:$0xf]
      %v158 = vld [vmem:[#allocation6 + $0x28] sm:$0xf]
      %v159 = vld [vmem:[#allocation6 + $0x2c] sm:$0xf]
      %v160 = vld [vmem:[#allocation6 + $0x30] sm:$0xf]
      %v161 = vld [vmem:[#allocation6 + $0x34] sm:$0xf]
      %v162 = vld [vmem:[#allocation6 + $0x38] sm:$0xf]
      %v163 = vld [vmem:[#allocation6 + $0x3c] sm:$0xf]
      %v180 = vunpack.c.l.b16 %v148
      %v181 = vunpack.c.l.b16 %v149
      %v182 = vunpack.c.l.b16 %v150
      %v183 = vunpack.c.l.b16 %v151
      %v184 = vunpack.c.l.b16 %v152
      %v185 = vunpack.c.l.b16 %v153
      %v186 = vunpack.c.l.b16 %v154
      %v187 = vunpack.c.l.b16 %v155
      %v188 = vunpack.c.l.b16 %v156
      %v189 = vunpack.c.l.b16 %v157
      %v190 = vunpack.c.l.b16 %v158
      %v191 = vunpack.c.l.b16 %v159
      %v192 = vunpack.c.l.b16 %v160
      %v193 = vunpack.c.l.b16 %v161
      %v194 = vunpack.c.l.b16 %v162
      %v195 = vunpack.c.l.b16 %v163
      %v196 = vpack.c.b16 %v181, %v180
      %v197 = vpack.c.b16 %v183, %v182
      %v198 = vpack.c.b16 %v185, %v184
      %v199 = vpack.c.b16 %v187, %v186
      %v200 = vpack.c.b16 %v189, %v188
      %v201 = vpack.c.b16 %v191, %v190
      %v202 = vpack.c.b16 %v193, %v192
      %v203 = vpack.c.b16 %v195, %v194
      %212 = vmatpush.bf16.msra.mxu0 %v203
      %213 = vmatpush.bf16.msra.mxu0 %v202
      %214 = vmatpush.bf16.msra.mxu0 %v201
      %215 = vmatpush.bf16.msra.mxu0 %v200
      %216 = vmatpush.bf16.msra.mxu0 %v199
      %217 = vmatpush.bf16.msra.mxu0 %v198
      %218 = vmatpush.bf16.msra.mxu0 %v197
      %219 = vmatpush.bf16.msra.mxu0 %v196
      %220 = vmatmul.bf16.gmra.mxu0 %v147
      %v221 = vpop.f32.mrf.mxu0
      %v222 = vadd.f32 0.0, %v221
      %v223 = vpop.f32.mrf.mxu0
      %224 = vdwg.mxu0
      %225 = vst [vmem:[#allocation8] sm:$0xff] %v222
    $region33: #{tpu_custom_call.1} parent=1 // pred_fallthru
      _
    // Predicated region
    $region34: #{tpu_custom_call.1} parent=1 // pred_check
      _
    $region35: #{tpu_custom_call.1} parent=1 // pred_check_branch
      %227 = sbr.rel (0) target = $region37
    $region36: #{tpu_custom_call.1} parent=1 // pred_region
      %229 = vsyncadd [#allocation5], 0
      %s231 = sshll.u32 [#allocation8], 4
      %s232 = int_to_ptr.vmem [resolvable:$true] %s231
      %s233 = sshll.u32 %s4, 4
      %s234 = int_to_ptr.hbm [resolvable:$true] %s233
      %236 = dma.vmem_to_hbm [thread:$0]  %s232, 128, %s234, [#allocation5]
    $region37: #{tpu_custom_call.1} parent=1 // pred_fallthru
      _
    // Predicated region
    $region38: #{tpu_custom_call.1} parent=1 // pred_check
      _
    $region39: #{tpu_custom_call.1} parent=1 // pred_check_branch
      %238 = sbr.rel (0) target = $region41
    $region40: #{tpu_custom_call.1} parent=1 // pred_region
      %240 = dma.done [#allocation5], 128
    $region41: #{tpu_custom_call.1} parent=1 // pred_fallthru
      _
    %241 = vsyncpa [#allocation4], 1
    %242 = vsyncpa [#allocation7], 1
    %243 = vsyncpa [#allocation5], 1

</llo_original>
